<compile_context>
chip_gen: v7x
topology: tpu7x:2x2x1
jax: 0.10.0
libtpu: 0.0.40
codegen_flags: <defaults>
</compile_context>

<pallas_src>
import jax
import jax.numpy as jnp
import numpy as np
from jax.experimental import pallas as pl
from jax.experimental.pallas import tpu as pltpu

EPS = 1e-5
MAX_TILE = 2048  # upper bound on the point tile; ~12 MB live VMEM at this size


def _round_up(n, m):
    return ((n + m - 1) // m) * m


def _ceil_div(a, b):
    return -(-a // b)


# ---------------------------------------------------------------------------
# Pallas kernels
# ---------------------------------------------------------------------------
def _fused_conv_max_kernel(x_ref, w1_ref, b1_ref, w2_ref, b2_ref, w3_ref, o_ref):
    """conv1(K=3)+relu -> conv2(bf16 MXU)+relu -> conv3(bf16 MXU) -> running max over points.

    x_ref : (1, tm, 3)   f32 point tile of one batch element
    w1_ref: (1, 3, 64)   f32 per-batch (transform- and BN-folded) conv1 weight
    w2_ref: (64, 128)    bf16 BN-folded weight (resident in VMEM)
    w3_ref: (128, 1024)  bf16 BN-folded weight (resident in VMEM)
    o_ref : (1, 1, 1024) f32 running per-(batch, split) max (same block across point tiles)

    Note: conv3 bias and the optional ReLU commute past the max and are applied outside.
    """
    @pl.when(pl.program_id(2) == 0)
    def _():
        o_ref[...] = jnp.full(o_ref.shape, -jnp.inf, dtype=o_ref.dtype)

    x = x_ref[0]      # (tm, 3)  f32
    w1 = w1_ref[0]    # (3, 64)  f32

    # conv1: K=3 contraction unrolled on the VPU in f32 (avoids a degenerate MXU matmul).
    h = (x[:, 0:1] * w1[0:1, :]
         + x[:, 1:2] * w1[1:2, :]
         + x[:, 2:3] * w1[2:3, :]) + b1_ref[...]
    h = jnp.maximum(h, 0.0)

    # conv2: (tm, 64) @ (64, 128) on the MXU, bf16 operands, f32 accumulation.
    h = jnp.dot(h.astype(jnp.bfloat16), w2_ref[...],
                preferred_element_type=jnp.float32) + b2_ref[...]
    h = jnp.maximum(h, 0.0)

    # conv3: (tm, 128) @ (128, 1024), bf16 operands, f32 accumulation.  Bias/ReLU deferred.
    h = jnp.dot(h.astype(jnp.bfloat16), w3_ref[...],
                preferred_element_type=jnp.float32)

    tile_max = jnp.max(h, axis=0, keepdims=True)          # (1, 1024) f32
    o_ref[0] = jnp.maximum(o_ref[0], tile_max)


def fused_conv_max(x, w1b, b1, w2, b2, w3, b3, *, relu3, max_tile=MAX_TILE):
    """x: (B, N, 3) -> (B, 1024) = max over points of the fused 3-layer conv stack.

    w1b is (B, 3, 64) (per-batch, input transform folded in) or (1, 3, 64) (shared).
    conv3 bias `b3` and the optional ReLU are applied to the (B, 1024) result here
    (they commute past the max).
    """
    B, N, C = x.shape
    assert C == 3

    # Point-axis split: gives megacore a second 'parallel' axis when B is odd
    # (otherwise a v7x TensorCore idles / load-imbalances).  No effect on v5e/v6e.
    num_splits = 2 if (B % 2 == 1) else 1

    n8 = _round_up(N, 8)
    per_split = max(1, _ceil_div(n8, num_splits * max_tile))
    total_tiles = num_splits * per_split
    tm = _round_up(_ceil_div(n8, total_tiles), 8)
    num_points_padded = tm * total_tiles
    if num_points_padded != N:
        # Pad the point axis by repeating the last point (cannot change the max).
        pad = jnp.broadcast_to(x[:, N - 1:N, :], (B, num_points_padded - N, C))
        x = jnp.concatenate([x, pad], axis=1)

    # bf16 MXU operands (accumulation stays f32 inside the kernel); halves weight DMA too.
    w2b = w2.astype(jnp.bfloat16)
    w3b = w3.astype(jnp.bfloat16)

    if w1b.shape[0] == 1:
        w1_map = lambda b, s, m: (0, 0, 0)
    else:
        w1_map = lambda b, s, m: (b, 0, 0)

    out = pl.pallas_call(
        _fused_conv_max_kernel,
        out_shape=jax.ShapeDtypeStruct((B * num_splits, 1, 1024), jnp.float32),
        grid=(B, num_splits, per_split),
        in_specs=[
            pl.BlockSpec((1, tm, 3), lambda b, s, m, ps=per_split: (b, s * ps + m, 0)),
            pl.BlockSpec((1, 3, 64), w1_map),
            pl.BlockSpec((1, 64), lambda b, s, m: (0, 0)),
            pl.BlockSpec((64, 128), lambda b, s, m: (0, 0)),
            pl.BlockSpec((1, 128), lambda b, s, m: (0, 0)),
            pl.BlockSpec((128, 1024), lambda b, s, m: (0, 0)),
        ],
        out_specs=pl.BlockSpec((1, 1, 1024),
                               lambda b, s, m, ns=num_splits: (b * ns + s, 0, 0)),
        compiler_params=pltpu.CompilerParams(
            dimension_semantics=("parallel", "parallel", "arbitrary"),
            vmem_limit_bytes=48 * 1024 * 1024),
    )(x, w1b, b1[None], w2b, b2[None], w3b)

    # Combine split maxes, then apply the deferred conv3 bias (+ReLU) on the tiny result.
    g = jnp.max(out.reshape(B, num_splits, 1024), axis=1) + b3[None, :]
    if relu3:
        g = jnp.maximum(g, 0.0)
    return g


def _stn_head_kernel(g_ref, w1_ref, b1_ref, w2_ref, b2_ref, w3_ref, b3_ref, o_ref):
    # fc1+bn4+relu -> fc2+bn5+relu -> fc3 (+identity folded into b3), all in one kernel.
    # fc1/fc2 weights arrive as bf16 (launch is DMA-bound); accumulation is f32.
    h = jnp.dot(g_ref[...].astype(jnp.bfloat16), w1_ref[...],
                preferred_element_type=jnp.float32) + b1_ref[...]
    h = jnp.maximum(h, 0.0)
    h = jnp.dot(h.astype(jnp.bfloat16), w2_ref[...],
                preferred_element_type=jnp.float32) + b2_ref[...]
    h = jnp.maximum(h, 0.0)
    o_ref[...] = jnp.dot(h, w3_ref[...], preferred_element_type=jnp.float32) + b3_ref[...]


def stn_fc_head(g, w1, b1, w2, b2, w3, b3):
    """g: (B, 1024) -> (B, 9).  M = B is tiny; one fused launch, everything in VMEM."""
    B = g.shape[0]
    return pl.pallas_call(
        _stn_head_kernel,
        out_shape=jax.ShapeDtypeStruct((B, 9), jnp.float32),
        grid=(1,),
        in_specs=[
            pl.BlockSpec((B, 1024), lambda i: (0, 0)),
            pl.BlockSpec((1024, 512), lambda i: (0, 0)),
            pl.BlockSpec((1, 512), lambda i: (0, 0)),
            pl.BlockSpec((512, 256), lambda i: (0, 0)),
            pl.BlockSpec((1, 256), lambda i: (0, 0)),
            pl.BlockSpec((256, 9), lambda i: (0, 0)),
            pl.BlockSpec((1, 9), lambda i: (0, 0)),
        ],
        out_specs=pl.BlockSpec((B, 9), lambda i: (0, 0)),
    )(g, w1.astype(jnp.bfloat16), b1[None], w2.astype(jnp.bfloat16), b2[None],
      w3, b3[None])


# ---------------------------------------------------------------------------
# Parameter setup + BN folding + glue
# ---------------------------------------------------------------------------
def init_params(key, channel=3):
    keys = iter(jax.random.split(key, 16))

    def dense(cin, cout, with_bn=True):
        k1, k2, k3 = jax.random.split(next(keys), 3)
        bound = 1.0 / np.sqrt(cin)
        layer = {
            "w": jax.random.uniform(k1, (cin, cout), jnp.float32, -bound, bound),
            "b": jax.random.uniform(k2, (cout,), jnp.float32, -bound, bound),
        }
        if with_bn:
            kb = jax.random.split(k3, 4)
            layer["bn"] = {
                "gamma": jax.random.uniform(kb[0], (cout,), jnp.float32, 0.5, 1.5),
                "beta": jax.random.uniform(kb[1], (cout,), jnp.float32, -0.1, 0.1),
                "mean": jax.random.uniform(kb[2], (cout,), jnp.float32, -0.1, 0.1),
                "var": jax.random.uniform(kb[3], (cout,), jnp.float32, 0.5, 1.5),
            }
        else:
            layer["bn"] = None
        return layer

    stn = {
        "conv1": dense(channel, 64),
        "conv2": dense(64, 128),
        "conv3": dense(128, 1024),
        "fc1": dense(1024, 512),
        "fc2": dense(512, 256),
        "fc3": dense(256, 9, with_bn=False),
    }
    return {
        "stn": stn,
        "conv1": dense(channel, 64),
        "conv2": dense(64, 128),
        "conv3": dense(128, 1024),
    }


def _fold_bn(layer):
    """Fold eval-mode BatchNorm (and the conv/linear bias) into (w_eff, b_eff)."""
    w, b, bn = layer["w"], layer["b"], layer["bn"]
    if bn is None:
        return w, b
    scale = bn["gamma"] / jnp.sqrt(bn["var"] + EPS)
    w_eff = w * scale[None, :]
    b_eff = (b - bn["mean"]) * scale + bn["beta"]
    return w_eff, b_eff


def stn3d_forward(p, x_bnc):
    B = x_bnc.shape[0]
    w1, b1 = _fold_bn(p["conv1"])
    w2, b2 = _fold_bn(p["conv2"])
    w3, b3 = _fold_bn(p["conv3"])
    g = fused_conv_max(x_bnc, w1[None], b1, w2, b2, w3, b3, relu3=True)

    fw1, fb1 = _fold_bn(p["fc1"])
    fw2, fb2 = _fold_bn(p["fc2"])
    fw3, fb3 = p["fc3"]["w"], p["fc3"]["b"]
    iden = jnp.eye(3, dtype=jnp.float32).reshape(9)
    out9 = stn_fc_head(g, fw1, fb1, fw2, fb2, fw3, fb3 + iden)
    return out9.reshape(B, 3, 3)


def pointnet_encoder_forward(params, x_bdn):
    """x_bdn: (B, D, N) exactly like the PyTorch NCW input.

    Returns (global_feat, trans, trans_feat) with trans_feat = None.
    """
    B, D, N = x_bdn.shape
    assert D == 3  # TODO(synk): D>3 feature-split branch not implemented.
    x_bnc = jnp.transpose(x_bdn, (0, 2, 1)).astype(jnp.float32)   # (B, N, 3)

    trans = stn3d_forward(params["stn"], x_bnc)                    # (B, 3, 3)

    w1, b1 = _fold_bn(params["conv1"])
    w2, b2 = _fold_bn(params["conv2"])
    w3, b3 = _fold_bn(params["conv3"])
    # Fold the per-batch input transform into conv1's weight: (x @ T) @ W1 = x @ (T @ W1).
    w1_eff = jnp.einsum("bij,jk->bik", trans, w1)                  # (B, 3, 64), tiny
    g = fused_conv_max(x_bnc, w1_eff, b1, w2, b2, w3, b3, relu3=False)
    return g, trans, None                                          # trans_feat is None


# ---------------------------------------------------------------------------
# Pure-JAX f32 reference (for correctness check)
# ---------------------------------------------------------------------------
def _ref_layer(layer, x, relu):
    y = x @ layer["w"] + layer["b"]
    bn = layer["bn"]
    if bn is not None:
        y = (y - bn["mean"]) / jnp.sqrt(bn["var"] + EPS) * bn["gamma"] + bn["beta"]
    if relu:
        y = jnp.maximum(y, 0.0)
    return y


def _ref_stn(p, x_bnc):
    B, N, C = x_bnc.shape
    h = x_bnc.reshape(B * N, C)
    h = _ref_layer(p["conv1"], h, True)
    h = _ref_layer(p["conv2"], h, True)
    h = _ref_layer(p["conv3"], h, True)
    h = jnp.max(h.reshape(B, N, 1024), axis=1)
    h = _ref_layer(p["fc1"], h, True)
    h = _ref_layer(p["fc2"], h, True)
    h = _ref_layer(p["fc3"], h, False)
    h = h + jnp.eye(3, dtype=jnp.float32).reshape(1, 9)
    return h.reshape(B, 3, 3)


def reference_forward(p, x_bdn):
    B, D, N = x_bdn.shape
    x_bnc = jnp.transpose(x_bdn, (0, 2, 1))
    trans = _ref_stn(p["stn"], x_bnc)
    x = jnp.einsum("bnd,bdk->bnk", x_bnc, trans)
    h = x.reshape(B * N, D)
    h = _ref_layer(p["conv1"], h, True)
    h = _ref_layer(p["conv2"], h, True)
    h = _ref_layer(p["conv3"], h, False)
    g = jnp.max(h.reshape(B, N, 1024), axis=1)
    return g, trans, None


# ---------------------------------------------------------------------------
if __name__ == "__main__":
    key = jax.random.PRNGKey(0)
    kp, kx = jax.random.split(key)
    B, D, N = 2, 3, 16
    params = init_params(kp, channel=D)
    x = jax.random.normal(kx, (B, D, N), dtype=jnp.float32)

    g, trans, trans_feat = pointnet_encoder_forward(params, x)
    g = jax.block_until_ready(g)
    trans = jax.block_until_ready(trans)

    g_ref, trans_ref, _ = reference_forward(params, x)

    assert g.shape == (B, 1024) and trans.shape == (B, 3, 3) and trans_feat is None
    # bf16 MXU operands -> tolerance loosened from 1e-3 to 2e-2 (f32 accumulation kept).
    assert np.allclose(np.asarray(trans), np.asarray(trans_ref), rtol=2e-2, atol=2e-2)
    assert np.allclose(np.asarray(g), np.asarray(g_ref), rtol=2e-2, atol=2e-2)

    # Second case: odd batch (exercises the point-axis megacore split) + ragged N (padding).
    B2, N2 = 1, 20
    x2 = jax.random.normal(jax.random.PRNGKey(1), (B2, D, N2), dtype=jnp.float32)
    g2, trans2, _ = pointnet_encoder_forward(params, x2)
    g2 = jax.block_until_ready(g2)
    g2_ref, trans2_ref, _ = reference_forward(params, x2)
    assert np.allclose(np.asarray(trans2), np.asarray(trans2_ref), rtol=2e-2, atol=2e-2)
    assert np.allclose(np.asarray(g2), np.asarray(g2_ref), rtol=2e-2, atol=2e-2)

    print("KERNEL_OK")
</pallas_src>

<mosaic_0001>
module attributes {stable_mosaic.version = 11 : i64} {
  func.func @_fused_conv_max_kernel(%arg0: i32, %arg1: i32, %arg2: i32, %arg3: memref<1x16x3xf32, #tpu.memory_space<vmem>>, %arg4: memref<1x3x64xf32, #tpu.memory_space<vmem>>, %arg5: memref<1x64xf32, #tpu.memory_space<vmem>>, %arg6: memref<64x128xbf16, #tpu.memory_space<vmem>>, %arg7: memref<1x128xf32, #tpu.memory_space<vmem>>, %arg8: memref<128x1024xbf16, #tpu.memory_space<vmem>>, %arg9: memref<1x1x1024xf32, #tpu.memory_space<vmem>>) attributes {dimension_semantics = [#tpu.dimension_semantics<parallel>, #tpu.dimension_semantics<parallel>, #tpu.dimension_semantics<arbitrary>], iteration_bounds = array<i64: 2, 1, 1>, scalar_prefetch = 0 : i64, scratch_operands = 0 : i64, tpu.core_type = #tpu.core_type<tc>, window_params = [{transform_indices = @transform_0, window_bounds = array<i64: 1, 16, 3>}, {pipeline_mode = #tpu.pipeline_mode<synchronous>, transform_indices = @transform_1, window_bounds = array<i64: 1, 3, 64>}, {pipeline_mode = #tpu.pipeline_mode<synchronous>, transform_indices = @transform_2, window_bounds = array<i64: 1, 64>}, {pipeline_mode = #tpu.pipeline_mode<synchronous>, transform_indices = @transform_3, window_bounds = array<i64: 64, 128>}, {pipeline_mode = #tpu.pipeline_mode<synchronous>, transform_indices = @transform_4, window_bounds = array<i64: 1, 128>}, {pipeline_mode = #tpu.pipeline_mode<synchronous>, transform_indices = @transform_5, window_bounds = array<i64: 128, 1024>}, {transform_indices = @transform_6, window_bounds = array<i64: 1, 1, 1024>}]} {
    %c0_i32 = arith.constant 0 : i32
    %0 = arith.cmpi eq, %arg2, %c0_i32 : i32
    %1 = arith.extui %0 : i1 to i32
    %c0_i32_0 = arith.constant 0 : i32
    %2 = arith.cmpi ne, %1, %c0_i32_0 : i32
    scf.if %2 {
      %cst_24 = arith.constant 0xFF800000 : f32
      %48 = vector.broadcast %cst_24 : f32 to vector<1x1x1024xf32>
      %c0_25 = arith.constant 0 : index
      %c0_26 = arith.constant 0 : index
      %c0_27 = arith.constant 0 : index
      %49 = vector.load %arg9[%c0_25, %c0_26, %c0_27] : memref<1x1x1024xf32, #tpu.memory_space<vmem>>, vector<1x1x1024xf32>
      tpu.vector_store %arg9[%c0_25, %c0_26, %c0_27], %48 {strides = array<i32>} : memref<1x1x1024xf32, #tpu.memory_space<vmem>>, vector<1x1x1024xf32>,
    } else {
    }
    %c0 = arith.constant 0 : index
    %c0_1 = arith.constant 0 : index
    %c0_2 = arith.constant 0 : index
    %3 = vector.load %arg3[%c0, %c0_1, %c0_2] : memref<1x16x3xf32, #tpu.memory_space<vmem>>, vector<1x16x3xf32>
    %4 = vector.shape_cast %3 : vector<1x16x3xf32> to vector<16x3xf32>
    %c0_3 = arith.constant 0 : index
    %c0_4 = arith.constant 0 : index
    %c0_5 = arith.constant 0 : index
    %5 = vector.load %arg4[%c0_3, %c0_4, %c0_5] : memref<1x3x64xf32, #tpu.memory_space<vmem>>, vector<1x3x64xf32>
    %6 = vector.shape_cast %5 : vector<1x3x64xf32> to vector<3x64xf32>
    %7 = vector.extract_strided_slice %4 {offsets = [0, 0], sizes = [16, 1], strides = [1, 1]} : vector<16x3xf32> to vector<16x1xf32>
    %8 = vector.extract_strided_slice %6 {offsets = [0, 0], sizes = [1, 64], strides = [1, 1]} : vector<3x64xf32> to vector<1x64xf32>
    %9 = vector.broadcast %7 : vector<16x1xf32> to vector<16x64xf32>
    %10 = vector.broadcast %8 : vector<1x64xf32> to vector<16x64xf32>
    %11 = arith.mulf %9, %10 : vector<16x64xf32>
    %12 = vector.extract_strided_slice %4 {offsets = [0, 1], sizes = [16, 1], strides = [1, 1]} : vector<16x3xf32> to vector<16x1xf32>
    %13 = vector.extract_strided_slice %6 {offsets = [1, 0], sizes = [1, 64], strides = [1, 1]} : vector<3x64xf32> to vector<1x64xf32>
    %14 = vector.broadcast %12 : vector<16x1xf32> to vector<16x64xf32>
    %15 = vector.broadcast %13 : vector<1x64xf32> to vector<16x64xf32>
    %16 = arith.mulf %14, %15 : vector<16x64xf32>
    %17 = arith.addf %11, %16 : vector<16x64xf32>
    %18 = vector.extract_strided_slice %4 {offsets = [0, 2], sizes = [16, 1], strides = [1, 1]} : vector<16x3xf32> to vector<16x1xf32>
    %19 = vector.extract_strided_slice %6 {offsets = [2, 0], sizes = [1, 64], strides = [1, 1]} : vector<3x64xf32> to vector<1x64xf32>
    %20 = vector.broadcast %18 : vector<16x1xf32> to vector<16x64xf32>
    %21 = vector.broadcast %19 : vector<1x64xf32> to vector<16x64xf32>
    %22 = arith.mulf %20, %21 : vector<16x64xf32>
    %23 = arith.addf %17, %22 : vector<16x64xf32>
    %c0_6 = arith.constant 0 : index
    %c0_7 = arith.constant 0 : index
    %24 = vector.load %arg5[%c0_6, %c0_7] : memref<1x64xf32, #tpu.memory_space<vmem>>, vector<1x64xf32>
    %25 = vector.broadcast %24 : vector<1x64xf32> to vector<16x64xf32>
    %26 = arith.addf %23, %25 : vector<16x64xf32>
    %cst = arith.constant 0.000000e+00 : f32
    %27 = vector.broadcast %cst : f32 to vector<16x64xf32>
    %28 = arith.maximumf %26, %27 : vector<16x64xf32>
    %29 = arith.truncf %28 : vector<16x64xf32> to vector<16x64xbf16>
    %c0_8 = arith.constant 0 : index
    %c0_9 = arith.constant 0 : index
    %30 = vector.load %arg6[%c0_8, %c0_9] : memref<64x128xbf16, #tpu.memory_space<vmem>>, vector<64x128xbf16>
    %cst_10 = arith.constant dense<0.000000e+00> : vector<16x128xf32>
    %31 = tpu.matmul %29, %30, %cst_10 {dimension_numbers = #tpu.dot_dimension_numbers<[1], [0], [0], [1], [0, 0, 1, 1], [], []>} : vector<16x64xbf16>, vector<64x128xbf16>, vector<16x128xf32> -> vector<16x128xf32>
    %c0_11 = arith.constant 0 : index
    %c0_12 = arith.constant 0 : index
    %32 = vector.load %arg7[%c0_11, %c0_12] : memref<1x128xf32, #tpu.memory_space<vmem>>, vector<1x128xf32>
    %33 = vector.broadcast %32 : vector<1x128xf32> to vector<16x128xf32>
    %34 = arith.addf %31, %33 : vector<16x128xf32>
    %cst_13 = arith.constant 0.000000e+00 : f32
    %35 = vector.broadcast %cst_13 : f32 to vector<16x128xf32>
    %36 = arith.maximumf %34, %35 : vector<16x128xf32>
    %37 = arith.truncf %36 : vector<16x128xf32> to vector<16x128xbf16>
    %c0_14 = arith.constant 0 : index
    %c0_15 = arith.constant 0 : index
    %38 = vector.load %arg8[%c0_14, %c0_15] : memref<128x1024xbf16, #tpu.memory_space<vmem>>, vector<128x1024xbf16>
    %cst_16 = arith.constant dense<0.000000e+00> : vector<16x1024xf32>
    %39 = tpu.matmul %37, %38, %cst_16 {dimension_numbers = #tpu.dot_dimension_numbers<[1], [0], [0], [1], [0, 0, 1, 1], [], []>} : vector<16x128xbf16>, vector<128x1024xbf16>, vector<16x1024xf32> -> vector<16x1024xf32>
    %cst_17 = arith.constant dense<0xFF800000> : vector<1024xf32>
    %40 = vector.multi_reduction <maximumf>, %39, %cst_17 [0] : vector<16x1024xf32> to vector<1024xf32>
    %41 = vector.shape_cast %40 : vector<1024xf32> to vector<1x1024xf32>
    %c0_18 = arith.constant 0 : index
    %c0_19 = arith.constant 0 : index
    %c0_20 = arith.constant 0 : index
    %42 = vector.load %arg9[%c0_18, %c0_19, %c0_20] : memref<1x1x1024xf32, #tpu.memory_space<vmem>>, vector<1x1x1024xf32>
    %43 = vector.shape_cast %42 : vector<1x1x1024xf32> to vector<1x1024xf32>
    %44 = arith.maximumf %43, %41 : vector<1x1024xf32>
    %c0_21 = arith.constant 0 : index
    %c0_22 = arith.constant 0 : index
    %c0_23 = arith.constant 0 : index
    %45 = vector.load %arg9[%c0_21, %c0_22, %c0_23] : memref<1x1x1024xf32, #tpu.memory_space<vmem>>, vector<1x1x1024xf32>
    %46 = vector.shape_cast %45 : vector<1x1x1024xf32> to vector<1x1024xf32>
    %47 = vector.shape_cast %44 : vector<1x1024xf32> to vector<1x1x1024xf32>
    tpu.vector_store %arg9[%c0_21, %c0_22, %c0_23], %47 {strides = array<i32>} : memref<1x1x1024xf32, #tpu.memory_space<vmem>>, vector<1x1x1024xf32>,
    return
  }
  func.func @transform_0(%arg0: i32, %arg1: i32, %arg2: i32) -> (i32, i32, i32) {
    %c1_i32 = arith.constant 1 : i32
    %0 = arith.muli %arg1, %c1_i32 : i32
    %1 = arith.addi %0, %arg2 : i32
    %c0_i32 = arith.constant 0 : i32
    %c0_i32_0 = arith.constant 0 : i32
    return %arg0, %1, %c0_i32 : i32, i32, i32
  }
  func.func @transform_1(%arg0: i32, %arg1: i32, %arg2: i32) -> (i32, i32, i32) {
    %c0_i32 = arith.constant 0 : i32
    %c0_i32_0 = arith.constant 0 : i32
    %c0_i32_1 = arith.constant 0 : i32
    %c0_i32_2 = arith.constant 0 : i32
    return %c0_i32, %c0_i32_0, %c0_i32_1 : i32, i32, i32
  }
  func.func @transform_2(%arg0: i32, %arg1: i32, %arg2: i32) -> (i32, i32) {
    %c0_i32 = arith.constant 0 : i32
    %c0_i32_0 = arith.constant 0 : i32
    %c0_i32_1 = arith.constant 0 : i32
    return %c0_i32, %c0_i32_0 : i32, i32
  }
  func.func @transform_3(%arg0: i32, %arg1: i32, %arg2: i32) -> (i32, i32) {
    %c0_i32 = arith.constant 0 : i32
    %c0_i32_0 = arith.constant 0 : i32
    %c0_i32_1 = arith.constant 0 : i32
    return %c0_i32, %c0_i32_0 : i32, i32
  }
  func.func @transform_4(%arg0: i32, %arg1: i32, %arg2: i32) -> (i32, i32) {
    %c0_i32 = arith.constant 0 : i32
    %c0_i32_0 = arith.constant 0 : i32
    %c0_i32_1 = arith.constant 0 : i32
    return %c0_i32, %c0_i32_0 : i32, i32
  }
  func.func @transform_5(%arg0: i32, %arg1: i32, %arg2: i32) -> (i32, i32) {
    %c0_i32 = arith.constant 0 : i32
    %c0_i32_0 = arith.constant 0 : i32
    %c0_i32_1 = arith.constant 0 : i32
    return %c0_i32, %c0_i32_0 : i32, i32
  }
  func.func @transform_6(%arg0: i32, %arg1: i32, %arg2: i32) -> (i32, i32, i32) {
    %c1_i32 = arith.constant 1 : i32
    %0 = arith.muli %arg0, %c1_i32 : i32
    %1 = arith.addi %0, %arg1 : i32
    %c0_i32 = arith.constant 0 : i32
    %c0_i32_0 = arith.constant 0 : i32
    %c0_i32_1 = arith.constant 0 : i32
    return %1, %c0_i32, %c0_i32_0 : i32, i32, i32
  }
}

</mosaic_0001>

<llo_original>
// kernel: tpu_custom_call.1
$region0: #{tpu_custom_call.1}
  #allocation0 [shape = 'u32[]', space=smem, size = 0x4, offset = 0x4, fixed_abs, tag = 'smem constant byte address 0x4 - core index']
  #allocation1 [shape = 'u32[144,128]{1,0:T(1,128)}', space=vmem, size = 0x12000, scoped, tag = 'internal scratch']
  %s0 = inlined_call_operand.vmem [shape: f32[2,16,3], index: 0, kind: input, shape index: {}]
  %s1 = inlined_call_operand.vmem [shape: f32[1,3,64], index: 1, kind: input, shape index: {}]
  %s2 = inlined_call_operand.vmem [shape: f32[1,64], index: 2, kind: input, shape index: {}]
  %s3 = inlined_call_operand.vmem [shape: bf16[64,128], index: 3, kind: input, shape index: {}]
  %s4 = inlined_call_operand.vmem [shape: f32[1,128], index: 4, kind: input, shape index: {}]
  %s5 = inlined_call_operand.hbm [shape: bf16[128,1024], index: 5, kind: input, shape index: {}]
  %s6 = inlined_call_operand.hbm [shape: f32[2,1,1024], index: 6, kind: output, shape index: {}]
  %s7 = sld [smem:[#allocation0]]
  $region65: #{tpu_custom_call.1} parent=0
    _
  %s9 = ssub.s32 1, %s7
  %s10 = scalar_select 0, %s9, %s7
  $region1: #{tpu_custom_call.1} parent=0
    #allocation2 [shape = 'u8[262144]{0}', space=vmem, size = 0x40000, scoped, tag = 'input window, operand 5, single buffered']
    #allocation3 [shape = 's32[2]{0}', space=sflag, size = 0x8, scoped, tag = 'scoped memory for tpu_custom_call.1']
    #allocation4 [shape = 's32[2]{0}', space=sflag, size = 0x8, scoped, tag = 'scoped memory for tpu_custom_call.1']
    #allocation5 [shape = 'u8[8192]{0}', space=vmem, size = 0x2000, scoped, tag = 'output window, operand 0']
    %11 = vsyncpa [#allocation3], 0
    %12 = vsyncpa [#allocation4], 0
    %s13 = scalar_lea.sflag [#allocation4], 1
    %14 = vsyncpa %s13, 0
    loop: start=0, step=1, limit=4
    $region2: #{tpu_custom_call.1} parent=1 // loop_pre_header
      _
    $region3: #{tpu_custom_call.1} parent=1 // loop_header
      %s16 = sphi 0, %s20
      %p17 = scmp.ge.s32.totalorder %s16, 4
      %s23 = sphi 0, %s42
      %s24 = sphi 0, %s38
      %s25 = sphi 0, %s34
      %s26 = sphi 0, %s23
      %s27 = sphi 0, %s24
      %s28 = sphi 0, %s25
      %s29 = sphi 0, %s26
      %s30 = sphi 0, %s27
      %s31 = sphi 0, %s28
      %s49 = sphi 0, %s51
      %s52 = sphi 0, %s49
      %s53 = sphi 0, %s52
      %s69 = sphi 0, %s53
      %s73 = sphi 0, %s73
      %s75 = sphi 0, %s73
      %s76 = sphi 0, %s75
      %s90 = sphi 0, %s76
      %s94 = sphi 0, %s94
      %s96 = sphi 0, %s94
      %s97 = sphi 0, %s96
      %s111 = sphi 0, %s97
      %s115 = sphi 0, %s115
      %s117 = sphi 0, %s115
      %s118 = sphi 0, %s117
      %s132 = sphi 0, %s118
      %s136 = sphi 0, %s136
      %s138 = sphi 0, %s136
      %s139 = sphi 0, %s138
      %s153 = sphi 0, %s139
      %s157 = sphi 0, %s157
      %s159 = sphi 0, %s157
      %s160 = sphi 0, %s159
      %s174 = sphi 0, %s160
      %s182 = sphi 0, %s184
      %s185 = sphi 0, %s182
      %s186 = sphi 0, %s185
      %s202 = sphi 0, %s186
    $region4: #{tpu_custom_call.1} parent=1 // loop_header_branch
      %19 = sbr.rel (%p17) target = $region8
    $region5: #{tpu_custom_call.1} parent=1 // loop_body
      %s21 = ssub.s32 %s16, 1
      %s22 = ssub.s32 %s16, 2
      %s32 = sadd.s32 1, %s25
      %p33 = scmp.ge.s32.totalorder %s32, 1
      %s34 = scalar_select %p33, 0, %s32
      %s35 = sadd.s32 1, %s24
      %s36 = scalar_select %p33, %s35, %s24
      %p37 = scmp.ge.s32.totalorder %s36, 1
      %s38 = scalar_select %p37, 0, %s36
      %s39 = sadd.s32 1, %s23
      %s40 = scalar_select %p37, %s39, %s23
      %p41 = scmp.ge.s32.totalorder %s40, 2
      %s42 = scalar_select %p41, 0, %s40
      %s43 = sadd.s32 %s24, %s25
      %s44 = sadd.s32 %s38, %s34
      %s45 = ssub.s32 %s23, %s42
      %s46 = ssub.s32 %s43, %s44
      %s47 = sor.u32 %s45, %s46
      %p48 = scmp.eq.s32.totalorder %s47, 0
      %s50 = sadd.s32 %s49, 1
      %s51 = scalar_select %p48, %s49, %s50
      %p54 = pneg %p48
      %p55 = scmp.eq.s32.totalorder %s16, 1
      %p56 = por %p54, %p55
      %p57 = scmp.ne.s32.totalorder %s49, %s52
      %p58 = scmp.eq.s32.totalorder %s16, 0
      %p59 = por %p57, %p58
      %p60 = scmp.ne.s32.totalorder %s49, %s52
      %p61 = scmp.eq.s32.totalorder %s21, 1
      %p62 = por %p60, %p61
      %p63 = scmp.ne.s32.totalorder %s52, %s53
      %p64 = scmp.eq.s32.totalorder %s21, 0
      %p65 = por %p63, %p64
      %p66 = scmp.ne.s32.totalorder %s52, %s53
      %p67 = scmp.eq.s32.totalorder %s22, 1
      %p68 = por %p66, %p67
      %p70 = scmp.ne.s32.totalorder %s53, %s69
      %p71 = scmp.eq.s32.totalorder %s22, 0
      %p72 = por %p70, %p71
      %s74 = sadd.s32 %s73, 1
      %p77 = scmp.eq.s32.totalorder %s16, 1
      %p78 = scmp.ne.s32.totalorder %s73, %s75
      %p79 = scmp.eq.s32.totalorder %s16, 0
      %p80 = por %p78, %p79
      %p81 = scmp.ne.s32.totalorder %s73, %s75
      %p82 = scmp.eq.s32.totalorder %s21, 1
      %p83 = por %p81, %p82
      %p84 = scmp.ne.s32.totalorder %s75, %s76
      %p85 = scmp.eq.s32.totalorder %s21, 0
      %p86 = por %p84, %p85
      %p87 = scmp.ne.s32.totalorder %s75, %s76
      %p88 = scmp.eq.s32.totalorder %s22, 1
      %p89 = por %p87, %p88
      %p91 = scmp.ne.s32.totalorder %s76, %s90
      %p92 = scmp.eq.s32.totalorder %s22, 0
      %p93 = por %p91, %p92
      %s95 = sadd.s32 %s94, 1
      %p98 = scmp.eq.s32.totalorder %s16, 1
      %p99 = scmp.ne.s32.totalorder %s94, %s96
      %p100 = scmp.eq.s32.totalorder %s16, 0
      %p101 = por %p99, %p100
      %p102 = scmp.ne.s32.totalorder %s94, %s96
      %p103 = scmp.eq.s32.totalorder %s21, 1
      %p104 = por %p102, %p103
      %p105 = scmp.ne.s32.totalorder %s96, %s97
      %p106 = scmp.eq.s32.totalorder %s21, 0
      %p107 = por %p105, %p106
      %p108 = scmp.ne.s32.totalorder %s96, %s97
      %p109 = scmp.eq.s32.totalorder %s22, 1
      %p110 = por %p108, %p109
      %p112 = scmp.ne.s32.totalorder %s97, %s111
      %p113 = scmp.eq.s32.totalorder %s22, 0
      %p114 = por %p112, %p113
      %s116 = sadd.s32 %s115, 1
      %p119 = scmp.eq.s32.totalorder %s16, 1
      %p120 = scmp.ne.s32.totalorder %s115, %s117
      %p121 = scmp.eq.s32.totalorder %s16, 0
      %p122 = por %p120, %p121
      %p123 = scmp.ne.s32.totalorder %s115, %s117
      %p124 = scmp.eq.s32.totalorder %s21, 1
      %p125 = por %p123, %p124
      %p126 = scmp.ne.s32.totalorder %s117, %s118
      %p127 = scmp.eq.s32.totalorder %s21, 0
      %p128 = por %p126, %p127
      %p129 = scmp.ne.s32.totalorder %s117, %s118
      %p130 = scmp.eq.s32.totalorder %s22, 1
      %p131 = por %p129, %p130
      %p133 = scmp.ne.s32.totalorder %s118, %s132
      %p134 = scmp.eq.s32.totalorder %s22, 0
      %p135 = por %p133, %p134
      %s137 = sadd.s32 %s136, 1
      %p140 = scmp.eq.s32.totalorder %s16, 1
      %p141 = scmp.ne.s32.totalorder %s136, %s138
      %p142 = scmp.eq.s32.totalorder %s16, 0
      %p143 = por %p141, %p142
      %p144 = scmp.ne.s32.totalorder %s136, %s138
      %p145 = scmp.eq.s32.totalorder %s21, 1
      %p146 = por %p144, %p145
      %p147 = scmp.ne.s32.totalorder %s138, %s139
      %p148 = scmp.eq.s32.totalorder %s21, 0
      %p149 = por %p147, %p148
      %p150 = scmp.ne.s32.totalorder %s138, %s139
      %p151 = scmp.eq.s32.totalorder %s22, 1
      %p152 = por %p150, %p151
      %p154 = scmp.ne.s32.totalorder %s139, %s153
      %p155 = scmp.eq.s32.totalorder %s22, 0
      %p156 = por %p154, %p155
      %s158 = sadd.s32 %s157, 1
      %p161 = scmp.eq.s32.totalorder %s16, 1
      %p162 = scmp.ne.s32.totalorder %s157, %s159
      %p163 = scmp.eq.s32.totalorder %s16, 0
      %p164 = por %p162, %p163
      %p165 = scmp.ne.s32.totalorder %s157, %s159
      %p166 = scmp.eq.s32.totalorder %s21, 1
      %p167 = por %p165, %p166
      %p168 = scmp.ne.s32.totalorder %s159, %s160
      %p169 = scmp.eq.s32.totalorder %s21, 0
      %p170 = por %p168, %p169
      %p171 = scmp.ne.s32.totalorder %s159, %s160
      %p172 = scmp.eq.s32.totalorder %s22, 1
      %p173 = por %p171, %p172
      %p175 = scmp.ne.s32.totalorder %s160, %s174
      %p176 = scmp.eq.s32.totalorder %s22, 0
      %p177 = por %p175, %p176
      %s178 = sadd.s32 %s23, %s24
      %s179 = sadd.s32 %s42, %s38
      %s180 = ssub.s32 %s178, %s179
      %p181 = scmp.eq.s32.totalorder %s180, 0
      %s183 = sadd.s32 %s182, 1
      %s184 = scalar_select %p181, %s182, %s183
      %p187 = pneg %p181
      %p188 = scmp.eq.s32.totalorder %s16, 1
      %p189 = por %p187, %p188
      %p190 = scmp.ne.s32.totalorder %s182, %s185
      %p191 = scmp.eq.s32.totalorder %s16, 0
      %p192 = por %p190, %p191
      %p193 = scmp.ne.s32.totalorder %s182, %s185
      %p194 = scmp.eq.s32.totalorder %s21, 1
      %p195 = por %p193, %p194
      %p196 = scmp.ne.s32.totalorder %s185, %s186
      %p197 = scmp.eq.s32.totalorder %s21, 0
      %p198 = por %p196, %p197
      %p199 = scmp.ne.s32.totalorder %s185, %s186
      %p200 = scmp.eq.s32.totalorder %s22, 1
      %p201 = por %p199, %p200
      %p203 = scmp.ne.s32.totalorder %s186, %s202
      %p204 = scmp.eq.s32.totalorder %s22, 0
      %p205 = por %p203, %p204
      %p206 = scmp.le.s32.totalorder 1, %s16
      %p207 = scmp.lt.s32.totalorder %s16, 3
      %p208 = pnand %p206, %p207
      %p209 = pneg %p208
      // Predicated region
      $region9: #{tpu_custom_call.1} parent=5 // pred_check
        _
      $region10: #{tpu_custom_call.1} parent=5 // pred_check_branch
        %211 = sbr.rel (%p208) target = $region12
      $region11: #{tpu_custom_call.1} parent=5 // pred_region
        %s212 = ssub.s32 %s16, 1
        // Predicated region
        $region13: #{tpu_custom_call.1} parent=11 // pred_check
          %p213 = pneg %p86
        $region14: #{tpu_custom_call.1} parent=11 // pred_check_branch
          %215 = sbr.rel (%p213) target = $region16
        $region15: #{tpu_custom_call.1} parent=11 // pred_region
          _
        $region16: #{tpu_custom_call.1} parent=11 // pred_fallthru
          _
        // Predicated region
        $region17: #{tpu_custom_call.1} parent=11 // pred_check
          %p216 = pneg %p107
        $region18: #{tpu_custom_call.1} parent=11 // pred_check_branch
          %218 = sbr.rel (%p216) target = $region20
        $region19: #{tpu_custom_call.1} parent=11 // pred_region
          _
        $region20: #{tpu_custom_call.1} parent=11 // pred_fallthru
          _
        // Predicated region
        $region21: #{tpu_custom_call.1} parent=11 // pred_check
          %p219 = pneg %p128
        $region22: #{tpu_custom_call.1} parent=11 // pred_check_branch
          %221 = sbr.rel (%p219) target = $region24
        $region23: #{tpu_custom_call.1} parent=11 // pred_region
          _
        $region24: #{tpu_custom_call.1} parent=11 // pred_fallthru
          _
        // Predicated region
        $region25: #{tpu_custom_call.1} parent=11 // pred_check
          %p222 = pneg %p149
        $region26: #{tpu_custom_call.1} parent=11 // pred_check_branch
          %224 = sbr.rel (%p222) target = $region28
        $region27: #{tpu_custom_call.1} parent=11 // pred_region
          _
        $region28: #{tpu_custom_call.1} parent=11 // pred_fallthru
          _
        // Predicated region
        $region29: #{tpu_custom_call.1} parent=11 // pred_check
          %p225 = pneg %p170
        $region30: #{tpu_custom_call.1} parent=11 // pred_check_branch
          %227 = sbr.rel (%p225) target = $region32
        $region31: #{tpu_custom_call.1} parent=11 // pred_region
          %s229 = ssub.s32 8192, 8192
          %230 = vsyncadd [#allocation3], %s229
          %s231 = sshll.u32 [#allocation2], 4
          %s232 = int_to_ptr.vmem [resolvable:$true] %s231
          %237 = dma.hbm_to_vmem [thread:$0]  %s5, 8192, %s232, [#allocation3], 512, 512, 32
        $region32: #{tpu_custom_call.1} parent=11 // pred_fallthru
          _
      $region12: #{tpu_custom_call.1} parent=5 // pred_fallthru
        _
      %p238 = scmp.lt.s32.totalorder %s16, 2
      // Predicated region
      $region33: #{tpu_custom_call.1} parent=5 // pred_check
        %p239 = pneg %p238
      $region34: #{tpu_custom_call.1} parent=5 // pred_check_branch
        %241 = sbr.rel (%p239) target = $region36
      $region35: #{tpu_custom_call.1} parent=5 // pred_region
        // Predicated region
        $region37: #{tpu_custom_call.1} parent=35 // pred_check
          %p242 = pneg %p59
        $region38: #{tpu_custom_call.1} parent=35 // pred_check_branch
          %244 = sbr.rel (%p242) target = $region40
        $region39: #{tpu_custom_call.1} parent=35 // pred_region
          %s245 = sadd.s32 %s24, %s25
          %s246 = smul.u32 2, %s245
          %p247 = scmp.lt.s32.totalorder %s23, 1
          %s248 = scalar_select %p247, %s23, 1
          %p249 = scmp.lt.s32.totalorder %s246, 1
          %s250 = scalar_select %p249, %s246, 1
          %s251 = smul.addr %s248, 2
          %s252 = sadd.s32 %s250, %s251
          %s253 = smul.addr %s252, 8
          %s254 = scalar_lea.vmem %s0, %s253
          %s255 = sadd.s32 %s24, %s25
          %s256 = smul.u32 2, %s255
        $region40: #{tpu_custom_call.1} parent=35 // pred_fallthru
          _
      $region36: #{tpu_custom_call.1} parent=5 // pred_fallthru
        _
      %p257 = scmp.le.s32.totalorder 1, %s16
      %p258 = scmp.lt.s32.totalorder %s16, 3
      %p259 = pnand %p257, %p258
      %p260 = pneg %p259
      // Predicated region
      $region41: #{tpu_custom_call.1} parent=5 // pred_check
        _
      $region42: #{tpu_custom_call.1} parent=5 // pred_check_branch
        %262 = sbr.rel (%p259) target = $region44
      $region43: #{tpu_custom_call.1} parent=5 // pred_region
        %s263 = ssub.s32 %s16, 1
        // Predicated region
        $region45: #{tpu_custom_call.1} parent=43 // pred_check
          %p264 = pneg %p170
        $region46: #{tpu_custom_call.1} parent=43 // pred_check_branch
          %266 = sbr.rel (%p264) target = $region48
        $region47: #{tpu_custom_call.1} parent=43 // pred_region
          %267 = dma.done [#allocation3], 8192
        $region48: #{tpu_custom_call.1} parent=43 // pred_fallthru
          _
        %s268 = sadd.s32 %s27, %s28
        %s269 = smul.u32 2, %s268
        %p270 = scmp.lt.s32.totalorder %s26, 1
        %s271 = scalar_select %p270, %s26, 1
        %p272 = scmp.lt.s32.totalorder %s269, 1
        %s273 = scalar_select %p272, %s269, 1
        %s274 = smul.addr %s271, 2
        %s275 = sadd.s32 %s273, %s274
        %s276 = smul.addr %s275, 8
        %s277 = scalar_lea.vmem %s0, %s276
        %p278 = pneg %p65
        %p279 = pneg %p62
        %p280 = pneg %p86
        %p281 = pneg %p83
        %p282 = pneg %p107
        %p283 = pneg %p104
        %p284 = pneg %p128
        %p285 = pneg %p125
        %p286 = pneg %p149
        %p287 = pneg %p146
        %p288 = pneg %p170
        %p289 = pneg %p167
        %p290 = pneg %p198
        %p291 = pneg %p195
        %s292 = sand.u32 %s185, 1
        %s293 = scalar_lea.sflag [#allocation4], %s292
        %s294 = sand.u32 %s185, 1
        %s295 = smul.addr %s294, 8
        %s296 = scalar_lea.vmem [#allocation5], %s295
        %s297 = sadd.s32 %s27, %s28
        %s298 = smul.u32 2, %s297
        %p299 = scmp.lt.s32.totalorder %s26, 1
        %s300 = scalar_select %p299, %s26, 1
        %p301 = scmp.lt.s32.totalorder %s298, 1
        %s302 = scalar_select %p301, %s298, 1
        %s303 = smul.addr %s300, 2
        %s304 = sadd.s32 %s302, %s303
        %s305 = smul.addr %s304, 8
        %s306 = scalar_lea.vmem %s0, %s305
        %s307 = sadd.s32 %s27, %s28
        %s308 = smul.u32 2, %s307
        %s309 = sadd.s32 %s26, %s27
        %p311 = scmp.eq.s32.totalorder %s28, 0
        // Predicated region
        $region49: #{tpu_custom_call.1} parent=43 // pred_check
          %p312 = pneg %p311
        $region50: #{tpu_custom_call.1} parent=43 // pred_check_branch
          %314 = sbr.rel (%p312) target = $region52
        $region51: #{tpu_custom_call.1} parent=43 // pred_region
          %315 = vst [vmem:[%s296] sm:$0xff] -inf
        $region52: #{tpu_custom_call.1} parent=43 // pred_fallthru
          _
        %v316 = vld [vmem:[%s306] sm:$0xff]
        %v317 = vld [vmem:[%s306 + $0x8] sm:$0xff]
        %v318 = vld [vmem:[%s1] sm:$0x7]
        %320 = vset.pattern.permute.xlu0 0
        %321 = vperm.xlu0 %320, %v316
        %v322 = vpop.permute.xlu0 %321
        %325 = vset.pattern.permute.xlu0 0
        %326 = vperm.xlu0 %325, %v317
        %v327 = vpop.permute.xlu0 %326
        %v329 = vlaneseq
        %v330 = vshrl.u32 %v329, 7
        %v331 = vsub.s32 0, %v330
        %v332 = vrot.slane %v318, %v331
        %v333 = vmul.f32 %v322, %v332
        %v334 = vmul.f32 %v327, %v332
        %335 = vset.pattern.permute.xlu0 1
        %336 = vperm.xlu0 %335, %v316
        %v337 = vpop.permute.xlu0 %336
        %339 = vset.pattern.permute.xlu0 1
        %340 = vperm.xlu0 %339, %v317
        %v341 = vpop.permute.xlu0 %340
        %v343 = vlaneseq
        %v344 = vshrl.u32 %v343, 7
        %v345 = vsub.s32 1, %v344
        %v346 = vrot.slane %v318, %v345
        %v347 = vmul.f32 %v337, %v346
        %v348 = vmul.f32 %v341, %v346
        %v349 = vadd.f32 %v333, %v347
        %v350 = vadd.f32 %v334, %v348
        %351 = vset.pattern.permute.xlu0 2
        %352 = vperm.xlu0 %351, %v316
        %v353 = vpop.permute.xlu0 %352
        %355 = vset.pattern.permute.xlu0 2
        %356 = vperm.xlu0 %355, %v317
        %v357 = vpop.permute.xlu0 %356
        %v359 = vlaneseq
        %v360 = vshrl.u32 %v359, 7
        %v361 = vsub.s32 2, %v360
        %v362 = vrot.slane %v318, %v361
        %v363 = vmul.f32 %v353, %v362
        %v364 = vmul.f32 %v357, %v362
        %v365 = vadd.f32 %v349, %v363
        %v366 = vadd.f32 %v350, %v364
        %v367 = vld [vmem:[%s2] sm:$0x1]
        %v369 = vlaneseq
        %v370 = vshrl.u32 %v369, 7
        %v371 = vsub.s32 0, %v370
        %v372 = vrot.slane %v367, %v371
        %v374 = vadd.f32 %v365, %v372
        %v375 = vadd.f32 %v366, %v372
        %v376 = vmax.f32 %v374, 0.0
        %v377 = vmax.f32 %v375, 0.0
        %v378 = vpack.c.bf16 %v377, %v376
        %v379 = vld [vmem:[%s3] sm:$0xf]
        %v380 = vld [vmem:[%s3 + $0x4] sm:$0xf]
        %v381 = vld [vmem:[%s3 + $0x8] sm:$0xf]
        %v382 = vld [vmem:[%s3 + $0xc] sm:$0xf]
        %v383 = vld [vmem:[%s3 + $0x10] sm:$0xf]
        %v384 = vld [vmem:[%s3 + $0x14] sm:$0xf]
        %v385 = vld [vmem:[%s3 + $0x18] sm:$0xf]
        %v386 = vld [vmem:[%s3 + $0x1c] sm:$0xf]
        %v387 = vld [vmem:[%s4] sm:$0x1]
        %v389 = vlaneseq
        %v390 = vshrl.u32 %v389, 7
        %v391 = vsub.s32 0, %v390
        %v392 = vrot.slane %v387, %v391
        %v402 = vunpack.c.l.b16 %v379
        %v403 = vunpack.c.l.b16 %v380
        %v404 = vunpack.c.l.b16 %v381
        %v405 = vunpack.c.l.b16 %v382
        %v406 = vunpack.c.l.b16 %v383
        %v407 = vunpack.c.l.b16 %v384
        %v408 = vunpack.c.l.b16 %v385
        %v409 = vunpack.c.l.b16 %v386
        %v410 = vpack.c.b16 %v403, %v402
        %v411 = vpack.c.b16 %v405, %v404
        %v412 = vpack.c.b16 %v407, %v406
        %v413 = vpack.c.b16 %v409, %v408
        %vm418 = vcmask 523264
        %v420 = vsel %vm418, %v378, 0
        %422 = vmatprep.subr.bf16.mxu0 0
        %423 = vmatpush1.bf16.msra.mxu0 %v410
        %424 = vmatprep.subr.bf16.mxu0 0
        %425 = vmatpush1.bf16.msra.mxu0 %v411
        %426 = vmatprep.subr.bf16.mxu0 0
        %427 = vmatpush1.bf16.msra.mxu0 %v412
        %428 = vmatprep.subr.bf16.mxu0 0
        %429 = vmatpush1.bf16.msra.mxu0 %v413
        %430 = vmatprep.subr.bf16.mxu0 0
        %431 = vmatpush1.bf16.msra.mxu0 0
        %432 = vmatprep.subr.bf16.mxu0 0
        %433 = vmatpush1.bf16.msra.mxu0 0
        %434 = vmatprep.subr.bf16.mxu0 0
        %435 = vmatpush1.bf16.msra.mxu0 0
        %436 = vmatprep.subr.bf16.mxu0 0
        %437 = vmatpush1.bf16.msra.mxu0 0
        %438 = vmatprep.subr.bf16.mxu0 0
        %439 = vmatpush1.bf16.msra.mxu0 0
        %440 = vmatprep.subr.bf16.mxu0 0
        %441 = vmatpush1.bf16.msra.mxu0 0
        %442 = vmatprep.subr.bf16.mxu0 0
        %443 = vmatpush1.bf16.msra.mxu0 0
        %444 = vmatprep.subr.bf16.mxu0 0
        %445 = vmatpush1.bf16.msra.mxu0 0
        %446 = vmatprep.subr.bf16.mxu0 0
        %447 = vmatpush1.bf16.msra.mxu0 0
        %448 = vmatprep.subr.bf16.mxu0 0
        %449 = vmatpush1.bf16.msra.mxu0 0
        %450 = vmatprep.subr.bf16.mxu0 0
        %451 = vmatpush1.bf16.msra.mxu0 0
        %452 = vmatprep.subr.bf16.mxu0 0
        %453 = vmatpush1.bf16.msra.mxu0 0
        %454 = vmatprep.mubr.bf16.mxu0 0
        %455 = vmatmul.mubr.bf16.gmra.mrb[0].mxu0 %v420
        %v456 = vpop.f32.mrb[0].mxu0
        %v457 = vadd.f32 %v392, %v456
        %v458 = vpop.f32.mrb[0].mxu0
        %v459 = vpop.f32.mrb[0].mxu0
        %v460 = vadd.f32 %v392, %v459
        %v461 = vpop.f32.mrb[0].mxu0
        %462 = vdwg.mxu0
        %v463 = vmax.f32 %v457, 0.0
        %v464 = vmax.f32 %v460, 0.0
        %v465 = vpack.c.bf16 %v464, %v463
        %v466 = vld [vmem:[#allocation2] sm:$0xff]
        %v467 = vld [vmem:[#allocation2 + $0x8] sm:$0xff]
        %v468 = vld [vmem:[#allocation2 + $0x10] sm:$0xff]
        %v469 = vld [vmem:[#allocation2 + $0x18] sm:$0xff]
        %v470 = vld [vmem:[#allocation2 + $0x20] sm:$0xff]
        %v471 = vld [vmem:[#allocation2 + $0x28] sm:$0xff]
        %v472 = vld [vmem:[#allocation2 + $0x30] sm:$0xff]
        %v473 = vld [vmem:[#allocation2 + $0x38] sm:$0xff]
        %v474 = vld [vmem:[#allocation2 + $0x40] sm:$0xff]
        %v475 = vld [vmem:[#allocation2 + $0x48] sm:$0xff]
        %v476 = vld [vmem:[#allocation2 + $0x50] sm:$0xff]
        %v477 = vld [vmem:[#allocation2 + $0x58] sm:$0xff]
        %v478 = vld [vmem:[#allocation2 + $0x60] sm:$0xff]
        %v479 = vld [vmem:[#allocation2 + $0x68] sm:$0xff]
        %v480 = vld [vmem:[#allocation2 + $0x70] sm:$0xff]
        %v481 = vld [vmem:[#allocation2 + $0x78] sm:$0xff]
        %v482 = vld [vmem:[#allocation2 + $0x80] sm:$0xff]
        %v483 = vld [vmem:[#allocation2 + $0x88] sm:$0xff]
        %v484 = vld [vmem:[#allocation2 + $0x90] sm:$0xff]
        %v485 = vld [vmem:[#allocation2 + $0x98] sm:$0xff]
        %v486 = vld [vmem:[#allocation2 + $0xa0] sm:$0xff]
        %v487 = vld [vmem:[#allocation2 + $0xa8] sm:$0xff]
        %v488 = vld [vmem:[#allocation2 + $0xb0] sm:$0xff]
        %v489 = vld [vmem:[#allocation2 + $0xb8] sm:$0xff]
        %v490 = vld [vmem:[#allocation2 + $0xc0] sm:$0xff]
        %v491 = vld [vmem:[#allocation2 + $0xc8] sm:$0xff]
        %v492 = vld [vmem:[#allocation2 + $0xd0] sm:$0xff]
        %v493 = vld [vmem:[#allocation2 + $0xd8] sm:$0xff]
        %v494 = vld [vmem:[#allocation2 + $0xe0] sm:$0xff]
        %v495 = vld [vmem:[#allocation2 + $0xe8] sm:$0xff]
        %v496 = vld [vmem:[#allocation2 + $0xf0] sm:$0xff]
        %v497 = vld [vmem:[#allocation2 + $0xf8] sm:$0xff]
        %v498 = vld [vmem:[#allocation2 + $0x100] sm:$0xff]
        %v499 = vld [vmem:[#allocation2 + $0x108] sm:$0xff]
        %v500 = vld [vmem:[#allocation2 + $0x110] sm:$0xff]
        %v501 = vld [vmem:[#allocation2 + $0x118] sm:$0xff]
        %v502 = vld [vmem:[#allocation2 + $0x120] sm:$0xff]
        %v503 = vld [vmem:[#allocation2 + $0x128] sm:$0xff]
        %v504 = vld [vmem:[#allocation2 + $0x130] sm:$0xff]
        %v505 = vld [vmem:[#allocation2 + $0x138] sm:$0xff]
        %v506 = vld [vmem:[#allocation2 + $0x140] sm:$0xff]
        %v507 = vld [vmem:[#allocation2 + $0x148] sm:$0xff]
        %v508 = vld [vmem:[#allocation2 + $0x150] sm:$0xff]
        %v509 = vld [vmem:[#allocation2 + $0x158] sm:$0xff]
        %v510 = vld [vmem:[#allocation2 + $0x160] sm:$0xff]
        %v511 = vld [vmem:[#allocation2 + $0x168] sm:$0xff]
        %v512 = vld [vmem:[#allocation2 + $0x170] sm:$0xff]
        %v513 = vld [vmem:[#allocation2 + $0x178] sm:$0xff]
        %v514 = vld [vmem:[#allocation2 + $0x180] sm:$0xff]
        %v515 = vld [vmem:[#allocation2 + $0x188] sm:$0xff]
        %v516 = vld [vmem:[#allocation2 + $0x190] sm:$0xff]
        %v517 = vld [vmem:[#allocation2 + $0x198] sm:$0xff]
        %v518 = vld [vmem:[#allocation2 + $0x1a0] sm:$0xff]
        %v519 = vld [vmem:[#allocation2 + $0x1a8] sm:$0xff]
        %v520 = vld [vmem:[#allocation2 + $0x1b0] sm:$0xff]
        %v521 = vld [vmem:[#allocation2 + $0x1b8] sm:$0xff]
        %v522 = vld [vmem:[#allocation2 + $0x1c0] sm:$0xff]
        %v523 = vld [vmem:[#allocation2 + $0x1c8] sm:$0xff]
        %v524 = vld [vmem:[#allocation2 + $0x1d0] sm:$0xff]
        %v525 = vld [vmem:[#allocation2 + $0x1d8] sm:$0xff]
        %v526 = vld [vmem:[#allocation2 + $0x1e0] sm:$0xff]
        %v527 = vld [vmem:[#allocation2 + $0x1e8] sm:$0xff]
        %v528 = vld [vmem:[#allocation2 + $0x1f0] sm:$0xff]
        %v529 = vld [vmem:[#allocation2 + $0x1f8] sm:$0xff]
        %v594 = vunpack.c.l.b16 %v466
        %v595 = vunpack.c.h.b16 %v466
        %v596 = vunpack.c.l.b16 %v467
        %v597 = vunpack.c.h.b16 %v467
        %v598 = vunpack.c.l.b16 %v468
        %v599 = vunpack.c.h.b16 %v468
        %v600 = vunpack.c.l.b16 %v469
        %v601 = vunpack.c.h.b16 %v469
        %v602 = vunpack.c.l.b16 %v470
        %v603 = vunpack.c.h.b16 %v470
        %v604 = vunpack.c.l.b16 %v471
        %v605 = vunpack.c.h.b16 %v471
        %v606 = vunpack.c.l.b16 %v472
        %v607 = vunpack.c.h.b16 %v472
        %v608 = vunpack.c.l.b16 %v473
        %v609 = vunpack.c.h.b16 %v473
        %v610 = vunpack.c.l.b16 %v474
        %v611 = vunpack.c.h.b16 %v474
        %v612 = vunpack.c.l.b16 %v475
        %v613 = vunpack.c.h.b16 %v475
        %v614 = vunpack.c.l.b16 %v476
        %v615 = vunpack.c.h.b16 %v476
        %v616 = vunpack.c.l.b16 %v477
        %v617 = vunpack.c.h.b16 %v477
        %v618 = vunpack.c.l.b16 %v478
        %v619 = vunpack.c.h.b16 %v478
        %v620 = vunpack.c.l.b16 %v479
        %v621 = vunpack.c.h.b16 %v479
        %v622 = vunpack.c.l.b16 %v480
        %v623 = vunpack.c.h.b16 %v480
        %v624 = vunpack.c.l.b16 %v481
        %v625 = vunpack.c.h.b16 %v481
        %v626 = vunpack.c.l.b16 %v482
        %v627 = vunpack.c.h.b16 %v482
        %v628 = vunpack.c.l.b16 %v483
        %v629 = vunpack.c.h.b16 %v483
        %v630 = vunpack.c.l.b16 %v484
        %v631 = vunpack.c.h.b16 %v484
        %v632 = vunpack.c.l.b16 %v485
        %v633 = vunpack.c.h.b16 %v485
        %v634 = vunpack.c.l.b16 %v486
        %v635 = vunpack.c.h.b16 %v486
        %v636 = vunpack.c.l.b16 %v487
        %v637 = vunpack.c.h.b16 %v487
        %v638 = vunpack.c.l.b16 %v488
        %v639 = vunpack.c.h.b16 %v488
        %v640 = vunpack.c.l.b16 %v489
        %v641 = vunpack.c.h.b16 %v489
        %v642 = vunpack.c.l.b16 %v490
        %v643 = vunpack.c.h.b16 %v490
        %v644 = vunpack.c.l.b16 %v491
        %v645 = vunpack.c.h.b16 %v491
        %v646 = vunpack.c.l.b16 %v492
        %v647 = vunpack.c.h.b16 %v492
        %v648 = vunpack.c.l.b16 %v493
        %v649 = vunpack.c.h.b16 %v493
        %v650 = vunpack.c.l.b16 %v494
        %v651 = vunpack.c.h.b16 %v494
        %v652 = vunpack.c.l.b16 %v495
        %v653 = vunpack.c.h.b16 %v495
        %v654 = vunpack.c.l.b16 %v496
        %v655 = vunpack.c.h.b16 %v496
        %v656 = vunpack.c.l.b16 %v497
        %v657 = vunpack.c.h.b16 %v497
        %v658 = vunpack.c.l.b16 %v498
        %v659 = vunpack.c.h.b16 %v498
        %v660 = vunpack.c.l.b16 %v499
        %v661 = vunpack.c.h.b16 %v499
        %v662 = vunpack.c.l.b16 %v500
        %v663 = vunpack.c.h.b16 %v500
        %v664 = vunpack.c.l.b16 %v501
        %v665 = vunpack.c.h.b16 %v501
        %v666 = vunpack.c.l.b16 %v502
        %v667 = vunpack.c.h.b16 %v502
        %v668 = vunpack.c.l.b16 %v503
        %v669 = vunpack.c.h.b16 %v503
        %v670 = vunpack.c.l.b16 %v504
        %v671 = vunpack.c.h.b16 %v504
        %v672 = vunpack.c.l.b16 %v505
        %v673 = vunpack.c.h.b16 %v505
        %v674 = vunpack.c.l.b16 %v506
        %v675 = vunpack.c.h.b16 %v506
        %v676 = vunpack.c.l.b16 %v507
        %v677 = vunpack.c.h.b16 %v507
        %v678 = vunpack.c.l.b16 %v508
        %v679 = vunpack.c.h.b16 %v508
        %v680 = vunpack.c.l.b16 %v509
        %v681 = vunpack.c.h.b16 %v509
        %v682 = vunpack.c.l.b16 %v510
        %v683 = vunpack.c.h.b16 %v510
        %v684 = vunpack.c.l.b16 %v511
        %v685 = vunpack.c.h.b16 %v511
        %v686 = vunpack.c.l.b16 %v512
        %v687 = vunpack.c.h.b16 %v512
        %v688 = vunpack.c.l.b16 %v513
        %v689 = vunpack.c.h.b16 %v513
        %v690 = vunpack.c.l.b16 %v514
        %v691 = vunpack.c.h.b16 %v514
        %v692 = vunpack.c.l.b16 %v515
        %v693 = vunpack.c.h.b16 %v515
        %v694 = vunpack.c.l.b16 %v516
        %v695 = vunpack.c.h.b16 %v516
        %v696 = vunpack.c.l.b16 %v517
        %v697 = vunpack.c.h.b16 %v517
        %v698 = vunpack.c.l.b16 %v518
        %v699 = vunpack.c.h.b16 %v518
        %v700 = vunpack.c.l.b16 %v519
        %v701 = vunpack.c.h.b16 %v519
        %v702 = vunpack.c.l.b16 %v520
        %v703 = vunpack.c.h.b16 %v520
        %v704 = vunpack.c.l.b16 %v521
        %v705 = vunpack.c.h.b16 %v521
        %v706 = vunpack.c.l.b16 %v522
        %v707 = vunpack.c.h.b16 %v522
        %v708 = vunpack.c.l.b16 %v523
        %v709 = vunpack.c.h.b16 %v523
        %v710 = vunpack.c.l.b16 %v524
        %v711 = vunpack.c.h.b16 %v524
        %v712 = vunpack.c.l.b16 %v525
        %v713 = vunpack.c.h.b16 %v525
        %v714 = vunpack.c.l.b16 %v526
        %v715 = vunpack.c.h.b16 %v526
        %v716 = vunpack.c.l.b16 %v527
        %v717 = vunpack.c.h.b16 %v527
        %v718 = vunpack.c.l.b16 %v528
        %v719 = vunpack.c.h.b16 %v528
        %v720 = vunpack.c.l.b16 %v529
        %v721 = vunpack.c.h.b16 %v529
        %v722 = vpack.c.b16 %v602, %v594
        %v723 = vpack.c.b16 %v603, %v595
        %v724 = vpack.c.b16 %v604, %v596
        %v725 = vpack.c.b16 %v605, %v597
        %v726 = vpack.c.b16 %v606, %v598
        %v727 = vpack.c.b16 %v607, %v599
        %v728 = vpack.c.b16 %v608, %v600
        %v729 = vpack.c.b16 %v609, %v601
        %v730 = vpack.c.b16 %v618, %v610
        %v731 = vpack.c.b16 %v619, %v611
        %v732 = vpack.c.b16 %v620, %v612
        %v733 = vpack.c.b16 %v621, %v613
        %v734 = vpack.c.b16 %v622, %v614
        %v735 = vpack.c.b16 %v623, %v615
        %v736 = vpack.c.b16 %v624, %v616
        %v737 = vpack.c.b16 %v625, %v617
        %v738 = vpack.c.b16 %v634, %v626
        %v739 = vpack.c.b16 %v635, %v627
        %v740 = vpack.c.b16 %v636, %v628
        %v741 = vpack.c.b16 %v637, %v629
        %v742 = vpack.c.b16 %v638, %v630
        %v743 = vpack.c.b16 %v639, %v631
        %v744 = vpack.c.b16 %v640, %v632
        %v745 = vpack.c.b16 %v641, %v633
        %v746 = vpack.c.b16 %v650, %v642
        %v747 = vpack.c.b16 %v651, %v643
        %v748 = vpack.c.b16 %v652, %v644
        %v749 = vpack.c.b16 %v653, %v645
        %v750 = vpack.c.b16 %v654, %v646
        %v751 = vpack.c.b16 %v655, %v647
        %v752 = vpack.c.b16 %v656, %v648
        %v753 = vpack.c.b16 %v657, %v649
        %v754 = vpack.c.b16 %v666, %v658
        %v755 = vpack.c.b16 %v667, %v659
        %v756 = vpack.c.b16 %v668, %v660
        %v757 = vpack.c.b16 %v669, %v661
        %v758 = vpack.c.b16 %v670, %v662
        %v759 = vpack.c.b16 %v671, %v663
        %v760 = vpack.c.b16 %v672, %v664
        %v761 = vpack.c.b16 %v673, %v665
        %v762 = vpack.c.b16 %v682, %v674
        %v763 = vpack.c.b16 %v683, %v675
        %v764 = vpack.c.b16 %v684, %v676
        %v765 = vpack.c.b16 %v685, %v677
        %v766 = vpack.c.b16 %v686, %v678
        %v767 = vpack.c.b16 %v687, %v679
        %v768 = vpack.c.b16 %v688, %v680
        %v769 = vpack.c.b16 %v689, %v681
        %v770 = vpack.c.b16 %v698, %v690
        %v771 = vpack.c.b16 %v699, %v691
        %v772 = vpack.c.b16 %v700, %v692
        %v773 = vpack.c.b16 %v701, %v693
        %v774 = vpack.c.b16 %v702, %v694
        %v775 = vpack.c.b16 %v703, %v695
        %v776 = vpack.c.b16 %v704, %v696
        %v777 = vpack.c.b16 %v705, %v697
        %v778 = vpack.c.b16 %v714, %v706
        %v779 = vpack.c.b16 %v715, %v707
        %v780 = vpack.c.b16 %v716, %v708
        %v781 = vpack.c.b16 %v717, %v709
        %v782 = vpack.c.b16 %v718, %v710
        %v783 = vpack.c.b16 %v719, %v711
        %v784 = vpack.c.b16 %v720, %v712
        %v785 = vpack.c.b16 %v721, %v713
        %850 = vmatprep.subr.bf16.mxu0 %v723
        %851 = vmatpush1.bf16.msra.mxu0 %v722
        %852 = vmatprep.subr.bf16.mxu0 %v731
        %853 = vmatpush1.bf16.msra.mxu0 %v730
        %854 = vmatprep.subr.bf16.mxu0 %v739
        %855 = vmatpush1.bf16.msra.mxu0 %v738
        %856 = vmatprep.subr.bf16.mxu0 %v747
        %857 = vmatpush1.bf16.msra.mxu0 %v746
        %858 = vmatprep.subr.bf16.mxu0 %v755
        %859 = vmatpush1.bf16.msra.mxu0 %v754
        %860 = vmatprep.subr.bf16.mxu0 %v763
        %861 = vmatpush1.bf16.msra.mxu0 %v762
        %862 = vmatprep.subr.bf16.mxu0 %v771
        %863 = vmatpush1.bf16.msra.mxu0 %v770
        %864 = vmatprep.subr.bf16.mxu0 %v779
        %865 = vmatpush1.bf16.msra.mxu0 %v778
        %866 = vmatprep.subr.bf16.mxu0 0
        %867 = vmatpush1.bf16.msra.mxu0 0
        %868 = vmatprep.subr.bf16.mxu0 0
        %869 = vmatpush1.bf16.msra.mxu0 0
        %870 = vmatprep.subr.bf16.mxu0 0
        %871 = vmatpush1.bf16.msra.mxu0 0
        %872 = vmatprep.subr.bf16.mxu0 0
        %873 = vmatpush1.bf16.msra.mxu0 0
        %874 = vmatprep.subr.bf16.mxu0 0
        %875 = vmatpush1.bf16.msra.mxu0 0
        %876 = vmatprep.subr.bf16.mxu0 0
        %877 = vmatpush1.bf16.msra.mxu0 0
        %878 = vmatprep.subr.bf16.mxu0 0
        %879 = vmatpush1.bf16.msra.mxu0 0
        %880 = vmatprep.subr.bf16.mxu0 0
        %881 = vmatpush1.bf16.msra.mxu0 0
        %882 = vmatprep.mubr.bf16.mxu0 0
        %883 = vmatmul.mubr.bf16.gmra.mrb[0].mxu0 %v465
        %v884 = vpop.f32.mrb[0].mxu0
        %v885 = vadd.f32 0.0, %v884
        %v886 = vpop.f32.mrb[0].mxu0
        %v887 = vadd.f32 0.0, %v886
        %v888 = vpop.f32.mrb[0].mxu0
        %v889 = vadd.f32 0.0, %v888
        %v890 = vpop.f32.mrb[0].mxu0
        %v891 = vadd.f32 0.0, %v890
        %892 = vdwg.mxu0
        %893 = vmatprep.subr.bf16.mxu0 %v725
        %894 = vmatpush1.bf16.msra.mxu0 %v724
        %895 = vmatprep.subr.bf16.mxu0 %v733
        %896 = vmatpush1.bf16.msra.mxu0 %v732
        %897 = vmatprep.subr.bf16.mxu0 %v741
        %898 = vmatpush1.bf16.msra.mxu0 %v740
        %899 = vmatprep.subr.bf16.mxu0 %v749
        %900 = vmatpush1.bf16.msra.mxu0 %v748
        %901 = vmatprep.subr.bf16.mxu0 %v757
        %902 = vmatpush1.bf16.msra.mxu0 %v756
        %903 = vmatprep.subr.bf16.mxu0 %v765
        %904 = vmatpush1.bf16.msra.mxu0 %v764
        %905 = vmatprep.subr.bf16.mxu0 %v773
        %906 = vmatpush1.bf16.msra.mxu0 %v772
        %907 = vmatprep.subr.bf16.mxu0 %v781
        %908 = vmatpush1.bf16.msra.mxu0 %v780
        %909 = vmatprep.subr.bf16.mxu0 0
        %910 = vmatpush1.bf16.msra.mxu0 0
        %911 = vmatprep.subr.bf16.mxu0 0
        %912 = vmatpush1.bf16.msra.mxu0 0
        %913 = vmatprep.subr.bf16.mxu0 0
        %914 = vmatpush1.bf16.msra.mxu0 0
        %915 = vmatprep.subr.bf16.mxu0 0
        %916 = vmatpush1.bf16.msra.mxu0 0
        %917 = vmatprep.subr.bf16.mxu0 0
        %918 = vmatpush1.bf16.msra.mxu0 0
        %919 = vmatprep.subr.bf16.mxu0 0
        %920 = vmatpush1.bf16.msra.mxu0 0
        %921 = vmatprep.subr.bf16.mxu0 0
        %922 = vmatpush1.bf16.msra.mxu0 0
        %923 = vmatprep.subr.bf16.mxu0 0
        %924 = vmatpush1.bf16.msra.mxu0 0
        %925 = vmatprep.mubr.bf16.mxu0 0
        %926 = vmatmul.mubr.bf16.gmra.mrb[0].mxu0 %v465
        %v927 = vpop.f32.mrb[0].mxu0
        %v928 = vadd.f32 0.0, %v927
        %v929 = vpop.f32.mrb[0].mxu0
        %v930 = vadd.f32 0.0, %v929
        %v931 = vpop.f32.mrb[0].mxu0
        %v932 = vadd.f32 0.0, %v931
        %v933 = vpop.f32.mrb[0].mxu0
        %v934 = vadd.f32 0.0, %v933
        %935 = vdwg.mxu0
        %936 = vmatprep.subr.bf16.mxu0 %v727
        %937 = vmatpush1.bf16.msra.mxu0 %v726
        %938 = vmatprep.subr.bf16.mxu0 %v735
        %939 = vmatpush1.bf16.msra.mxu0 %v734
        %940 = vmatprep.subr.bf16.mxu0 %v743
        %941 = vmatpush1.bf16.msra.mxu0 %v742
        %942 = vmatprep.subr.bf16.mxu0 %v751
        %943 = vmatpush1.bf16.msra.mxu0 %v750
        %944 = vmatprep.subr.bf16.mxu0 %v759
        %945 = vmatpush1.bf16.msra.mxu0 %v758
        %946 = vmatprep.subr.bf16.mxu0 %v767
        %947 = vmatpush1.bf16.msra.mxu0 %v766
        %948 = vmatprep.subr.bf16.mxu0 %v775
        %949 = vmatpush1.bf16.msra.mxu0 %v774
        %950 = vmatprep.subr.bf16.mxu0 %v783
        %951 = vmatpush1.bf16.msra.mxu0 %v782
        %952 = vmatprep.subr.bf16.mxu0 0
        %953 = vmatpush1.bf16.msra.mxu0 0
        %954 = vmatprep.subr.bf16.mxu0 0
        %955 = vmatpush1.bf16.msra.mxu0 0
        %956 = vmatprep.subr.bf16.mxu0 0
        %957 = vmatpush1.bf16.msra.mxu0 0
        %958 = vmatprep.subr.bf16.mxu0 0
        %959 = vmatpush1.bf16.msra.mxu0 0
        %960 = vmatprep.subr.bf16.mxu0 0
        %961 = vmatpush1.bf16.msra.mxu0 0
        %962 = vmatprep.subr.bf16.mxu0 0
        %963 = vmatpush1.bf16.msra.mxu0 0
        %964 = vmatprep.subr.bf16.mxu0 0
        %965 = vmatpush1.bf16.msra.mxu0 0
        %966 = vmatprep.subr.bf16.mxu0 0
        %967 = vmatpush1.bf16.msra.mxu0 0
        %968 = vmatprep.mubr.bf16.mxu0 0
        %969 = vmatmul.mubr.bf16.gmra.mrb[0].mxu0 %v465
        %v970 = vpop.f32.mrb[0].mxu0
        %v971 = vadd.f32 0.0, %v970
        %v972 = vpop.f32.mrb[0].mxu0
        %v973 = vadd.f32 0.0, %v972
        %v974 = vpop.f32.mrb[0].mxu0
        %v975 = vadd.f32 0.0, %v974
        %v976 = vpop.f32.mrb[0].mxu0
        %v977 = vadd.f32 0.0, %v976
        %978 = vdwg.mxu0
        %979 = vmatprep.subr.bf16.mxu0 %v729
        %980 = vmatpush1.bf16.msra.mxu0 %v728
        %981 = vmatprep.subr.bf16.mxu0 %v737
        %982 = vmatpush1.bf16.msra.mxu0 %v736
        %983 = vmatprep.subr.bf16.mxu0 %v745
        %984 = vmatpush1.bf16.msra.mxu0 %v744
        %985 = vmatprep.subr.bf16.mxu0 %v753
        %986 = vmatpush1.bf16.msra.mxu0 %v752
        %987 = vmatprep.subr.bf16.mxu0 %v761
        %988 = vmatpush1.bf16.msra.mxu0 %v760
        %989 = vmatprep.subr.bf16.mxu0 %v769
        %990 = vmatpush1.bf16.msra.mxu0 %v768
        %991 = vmatprep.subr.bf16.mxu0 %v777
        %992 = vmatpush1.bf16.msra.mxu0 %v776
        %993 = vmatprep.subr.bf16.mxu0 %v785
        %994 = vmatpush1.bf16.msra.mxu0 %v784
        %995 = vmatprep.subr.bf16.mxu0 0
        %996 = vmatpush1.bf16.msra.mxu0 0
        %997 = vmatprep.subr.bf16.mxu0 0
        %998 = vmatpush1.bf16.msra.mxu0 0
        %999 = vmatprep.subr.bf16.mxu0 0
        %1000 = vmatpush1.bf16.msra.mxu0 0
        %1001 = vmatprep.subr.bf16.mxu0 0
        %1002 = vmatpush1.bf16.msra.mxu0 0
        %1003 = vmatprep.subr.bf16.mxu0 0
        %1004 = vmatpush1.bf16.msra.mxu0 0
        %1005 = vmatprep.subr.bf16.mxu0 0
        %1006 = vmatpush1.bf16.msra.mxu0 0
        %1007 = vmatprep.subr.bf16.mxu0 0
        %1008 = vmatpush1.bf16.msra.mxu0 0
        %1009 = vmatprep.subr.bf16.mxu0 0
        %1010 = vmatpush1.bf16.msra.mxu0 0
        %1011 = vmatprep.mubr.bf16.mxu0 0
        %1012 = vmatmul.mubr.bf16.gmra.mrb[0].mxu0 %v465
        %v1013 = vpop.f32.mrb[0].mxu0
        %v1014 = vadd.f32 0.0, %v1013
        %v1015 = vpop.f32.mrb[0].mxu0
        %v1016 = vadd.f32 0.0, %v1015
        %v1017 = vpop.f32.mrb[0].mxu0
        %v1018 = vadd.f32 0.0, %v1017
        %v1019 = vpop.f32.mrb[0].mxu0
        %v1020 = vadd.f32 0.0, %v1019
        %1021 = vdwg.mxu0
        %v1022 = vmax.f32 %v885, %v889
        %v1023 = vrot.slane %v1022, 4
        %v1024 = vmax.f32 %v1022, %v1023
        %v1025 = vrot.slane %v1024, 2
        %v1026 = vmax.f32 %v1024, %v1025
        %v1027 = vrot.slane %v1026, 1
        %v1028 = vmax.f32 %v1026, %v1027
        %v1029 = vmax.f32 %v887, %v891
        %v1030 = vrot.slane %v1029, 4
        %v1031 = vmax.f32 %v1029, %v1030
        %v1032 = vrot.slane %v1031, 2
        %v1033 = vmax.f32 %v1031, %v1032
        %v1034 = vrot.slane %v1033, 1
        %v1035 = vmax.f32 %v1033, %v1034
        %v1036 = vmax.f32 %v928, %v932
        %v1037 = vrot.slane %v1036, 4
        %v1038 = vmax.f32 %v1036, %v1037
        %v1039 = vrot.slane %v1038, 2
        %v1040 = vmax.f32 %v1038, %v1039
        %v1041 = vrot.slane %v1040, 1
        %v1042 = vmax.f32 %v1040, %v1041
        %v1043 = vmax.f32 %v930, %v934
        %v1044 = vrot.slane %v1043, 4
        %v1045 = vmax.f32 %v1043, %v1044
        %v1046 = vrot.slane %v1045, 2
        %v1047 = vmax.f32 %v1045, %v1046
        %v1048 = vrot.slane %v1047, 1
        %v1049 = vmax.f32 %v1047, %v1048
        %v1050 = vmax.f32 %v971, %v975
        %v1051 = vrot.slane %v1050, 4
        %v1052 = vmax.f32 %v1050, %v1051
        %v1053 = vrot.slane %v1052, 2
        %v1054 = vmax.f32 %v1052, %v1053
        %v1055 = vrot.slane %v1054, 1
        %v1056 = vmax.f32 %v1054, %v1055
        %v1057 = vmax.f32 %v973, %v977
        %v1058 = vrot.slane %v1057, 4
        %v1059 = vmax.f32 %v1057, %v1058
        %v1060 = vrot.slane %v1059, 2
        %v1061 = vmax.f32 %v1059, %v1060
        %v1062 = vrot.slane %v1061, 1
        %v1063 = vmax.f32 %v1061, %v1062
        %v1064 = vmax.f32 %v1014, %v1018
        %v1065 = vrot.slane %v1064, 4
        %v1066 = vmax.f32 %v1064, %v1065
        %v1067 = vrot.slane %v1066, 2
        %v1068 = vmax.f32 %v1066, %v1067
        %v1069 = vrot.slane %v1068, 1
        %v1070 = vmax.f32 %v1068, %v1069
        %v1071 = vmax.f32 %v1016, %v1020
        %v1072 = vrot.slane %v1071, 4
        %v1073 = vmax.f32 %v1071, %v1072
        %v1074 = vrot.slane %v1073, 2
        %v1075 = vmax.f32 %v1073, %v1074
        %v1076 = vrot.slane %v1075, 1
        %v1077 = vmax.f32 %v1075, %v1076
        %v1078 = vld [vmem:[%s296] sm:$0xff]
        %v1087 = vcombine.low %v1028, %v1035
        %v1088 = vcombine.low %v1042, %v1049
        %v1089 = vcombine.low %v1056, %v1063
        %v1090 = vcombine.low %v1070, %v1077
        %v1092 = vunpack.c.l.s4 1966171168
        %v1093 = vunpack.c.0.s8 %v1092
        %v1094 = vlaneseq
        %v1095 = vshrl.u32 %v1094, 7
        %v1096 = vsub.s32 %v1093, %v1095
        %v1097 = vrot.slane %v1087, %v1096
        %v1099 = vunpack.c.l.s4 1966171168
        %v1100 = vunpack.c.0.s8 %v1099
        %v1101 = vlaneseq
        %v1102 = vshrl.u32 %v1101, 7
        %v1103 = vsub.s32 %v1100, %v1102
        %v1104 = vrot.slane %v1088, %v1103
        %v1106 = vunpack.c.l.s4 1966171168
        %v1107 = vunpack.c.0.s8 %v1106
        %v1108 = vlaneseq
        %v1109 = vshrl.u32 %v1108, 7
        %v1110 = vsub.s32 %v1107, %v1109
        %v1111 = vrot.slane %v1089, %v1110
        %v1113 = vunpack.c.l.s4 1966171168
        %v1114 = vunpack.c.0.s8 %v1113
        %v1115 = vlaneseq
        %v1116 = vshrl.u32 %v1115, 7
        %v1117 = vsub.s32 %v1114, %v1116
        %v1118 = vrot.slane %v1090, %v1117
        %v1119 = vcombine.low %v1097, %v1104
        %v1120 = vcombine.low %v1111, %v1118
        %v1122 = vunpack.c.l.s4 1966171168
        %v1123 = vunpack.c.0.s8 %v1122
        %v1124 = vlaneseq
        %v1125 = vshrl.u32 %v1124, 7
        %v1126 = vsub.s32 %v1123, %v1125
        %v1127 = vrot.slane %v1119, %v1126
        %v1129 = vunpack.c.l.s4 1966171168
        %v1130 = vunpack.c.0.s8 %v1129
        %v1131 = vlaneseq
        %v1132 = vshrl.u32 %v1131, 7
        %v1133 = vsub.s32 %v1130, %v1132
        %v1134 = vrot.slane %v1120, %v1133
        %v1135 = vcombine.low %v1127, %v1134
        %v1137 = vmax.f32 %v1078, %v1135
        %1138 = vst [vmem:[%s296] sm:$0xff] %v1137
        %s1139 = sand.u32 %s185, 1
        %s1140 = scalar_lea.sflag [#allocation4], %s1139
        %s1141 = sand.u32 %s185, 1
        %s1142 = smul.addr %s1141, 8
        %s1143 = scalar_lea.vmem [#allocation5], %s1142
        // Predicated region
        $region53: #{tpu_custom_call.1} parent=43 // pred_check
          %p1144 = pneg %p195
        $region54: #{tpu_custom_call.1} parent=43 // pred_check_branch
          %1146 = sbr.rel (%p1144) target = $region56
        $region55: #{tpu_custom_call.1} parent=43 // pred_region
          %s1147 = sadd.s32 %s26, %s27
          %s1149 = ssub.s32 128, 128
          %1150 = vsyncadd %s1140, %s1149
          %s1151 = smul.addr %s1147, 8
          %s1152 = smul.addr %s1151, 16
          %s1153 = scalar_lea.hbm %s6, %s1152
          %s1155 = sshll.u32 %s1143, 4
          %s1156 = int_to_ptr.vmem [resolvable:$true] %s1155
          %1158 = dma.vmem_to_hbm [thread:$0]  %s1156, 128, %s1153, %s1140
        $region56: #{tpu_custom_call.1} parent=43 // pred_fallthru
          _
      $region44: #{tpu_custom_call.1} parent=5 // pred_fallthru
        _
      %p1159 = scmp.le.s32.totalorder 2, %s16
      // Predicated region
      $region57: #{tpu_custom_call.1} parent=5 // pred_check
        %p1160 = pneg %p1159
      $region58: #{tpu_custom_call.1} parent=5 // pred_check_branch
        %1162 = sbr.rel (%p1160) target = $region60
      $region59: #{tpu_custom_call.1} parent=5 // pred_region
        %s1163 = ssub.s32 %s16, 2
        // Predicated region
        $region61: #{tpu_custom_call.1} parent=59 // pred_check
          %p1164 = pneg %p201
        $region62: #{tpu_custom_call.1} parent=59 // pred_check_branch
          %1166 = sbr.rel (%p1164) target = $region64
        $region63: #{tpu_custom_call.1} parent=59 // pred_region
          %s1167 = sand.u32 %s186, 1
          %s1168 = scalar_lea.sflag [#allocation4], %s1167
          %s1169 = sand.u32 %s186, 1
          %s1170 = smul.addr %s1169, 8
          %s1171 = scalar_lea.vmem [#allocation5], %s1170
          %1172 = dma.done %s1168, 128
        $region64: #{tpu_custom_call.1} parent=59 // pred_fallthru
          _
      $region60: #{tpu_custom_call.1} parent=5 // pred_fallthru
        _
    $region6: #{tpu_custom_call.1} parent=1 // loop_footer
      %s20 = sadd.s32 1, %s16
    $region7: #{tpu_custom_call.1} parent=1 // loop_footer_branch
      %15 = sbr.rel target = $region3
    $region8: #{tpu_custom_call.1} parent=1 // loop_exit
      _
    %1173 = vsyncpa [#allocation3], 1
    %s1174 = scalar_lea.sflag [#allocation3], 1
    %1175 = vsyncpa %s1174, 1
    %1176 = vsyncpa [#allocation4], 1
    %s1177 = scalar_lea.sflag [#allocation4], 1
    %1178 = vsyncpa %s1177, 1

</llo_original>
